<compile_context>
chip_gen: v6e
topology: v6e:2x2x1
jax: 0.10.0
libtpu: 0.0.40
codegen_flags: <defaults>
</compile_context>

<pallas_src>
import functools

import jax
import jax.numpy as jnp
from jax.experimental import pallas as pl
from jax.experimental.pallas import tpu as pltpu

EPS = 1e-5
_VMEM_BUDGET = 28 << 20  # conservative: fits default 32 MiB scoped VMEM


def _round_up(x, m):
    return ((x + m - 1) // m) * m


def _post_layernorm_kernel(x_ref, wt_ref, b_ref, gamma_ref, beta_ref, o_ref):
    # x_ref: (tile_rows, D)   wt_ref: (D, D) already transposed (W^T)
    # b/gamma/beta: (1, D)
    x = x_ref[...]                      # keep native dtype as MXU operand
    wt = wt_ref[...]

    # func(x): Linear(dim, dim) -> x @ W^T + b  (W pre-transposed in wrapper,
    # so this is a plain matmul; f32 accumulate on the MXU).
    fx = jnp.dot(x, wt, preferred_element_type=jnp.float32)

    # residual add + bias in f32
    z = fx + b_ref[...].astype(jnp.float32) + x.astype(jnp.float32)

    # LayerNorm over last dim (biased variance, eps inside sqrt) — all f32.
    mean = jnp.mean(z, axis=-1, keepdims=True)
    centered = z - mean
    var = jnp.mean(centered * centered, axis=-1, keepdims=True)
    inv = jax.lax.rsqrt(var + EPS)      # EUP slot; one rsqrt per row
    y = (centered * inv) * gamma_ref[...].astype(jnp.float32) \
        + beta_ref[...].astype(jnp.float32)

    o_ref[...] = y.astype(o_ref.dtype)


def _pick_tile_rows(requested, n_rows, d, x_bytes, w_bytes):
    """Largest row tile (multiple of 8, <= requested) whose working set fits."""
    tr = min(requested, _round_up(n_rows, 8))
    tr = max(8, _round_up(tr, 8))
    # resident W^T (double-buffered by BlockSpec) + small param rows
    fixed = 2 * d * d * w_bytes + 3 * 2 * d * 4
    while tr > 8:
        # double-buffered x tile (input) + out tile (output) + f32 temporaries
        tiles = 2 * tr * d * x_bytes * 2 + 2 * tr * d * 4
        if fixed + tiles <= _VMEM_BUDGET:
            break
        tr -= 8
    return tr


@functools.partial(jax.jit, static_argnames=("tile_rows",))
def post_layer_norm(x, w, b, gamma, beta, *, tile_rows=512):
    B, S, D = x.shape
    N = B * S

    x2 = x.reshape(N, D)
    wt = w.T                      # transpose ONCE here, not per grid step
    b2 = b.reshape(1, D)
    g2 = gamma.reshape(1, D)
    be2 = beta.reshape(1, D)

    x_bytes = jnp.dtype(x.dtype).itemsize
    w_bytes = jnp.dtype(w.dtype).itemsize

    tr = _pick_tile_rows(tile_rows, N, D, x_bytes, w_bytes)
    n_pad = _round_up(N, tr)
    if n_pad != N:
        x2 = jnp.pad(x2, ((0, n_pad - N), (0, 0)))

    grid = (n_pad // tr,)

    # double-buffered x / out tiles + resident (double-buffered) W + params.
    vmem_need = (2 * tr * D * x_bytes) * 2 + 2 * D * D * w_bytes \
        + 2 * tr * D * 4 + 8 * D * 4
    vmem_limit = min(max(int(1.25 * vmem_need) + (1 << 20), 32 << 20), 64 << 20)

    cost = pl.CostEstimate(
        flops=2 * n_pad * D * D + 10 * n_pad * D,
        transcendentals=n_pad,
        bytes_accessed=2 * n_pad * D * x_bytes + D * D * w_bytes + 3 * D * 4,
    )

    out = pl.pallas_call(
        _post_layernorm_kernel,
        out_shape=jax.ShapeDtypeStruct((n_pad, D), x.dtype),
        grid_spec=pltpu.PrefetchScalarGridSpec(
            num_scalar_prefetch=0,
            grid=grid,
            in_specs=[
                pl.BlockSpec((tr, D), lambda i: (i, 0)),   # x row tile
                pl.BlockSpec((D, D), lambda i: (0, 0)),    # W^T (resident)
                pl.BlockSpec((1, D), lambda i: (0, 0)),    # bias
                pl.BlockSpec((1, D), lambda i: (0, 0)),    # gamma
                pl.BlockSpec((1, D), lambda i: (0, 0)),    # beta
            ],
            out_specs=pl.BlockSpec((tr, D), lambda i: (i, 0)),
        ),
        compiler_params=pltpu.CompilerParams(
            dimension_semantics=("parallel",),
            vmem_limit_bytes=vmem_limit,
        ),
        cost_estimate=cost,
    )(x2, wt, b2, g2, be2)

    if n_pad != N:
        out = out[:N]
    return out.reshape(B, S, D)


def _reference(x, w, b, gamma, beta):
    fx = jnp.einsum("bsd,ed->bse", x, w) + b
    z = fx + x
    mean = jnp.mean(z, axis=-1, keepdims=True)
    var = jnp.mean((z - mean) ** 2, axis=-1, keepdims=True)
    return (z - mean) / jnp.sqrt(var + EPS) * gamma + beta


if __name__ == "__main__":
    key = jax.random.PRNGKey(0)
    batch, seq, dim = 2, 8, 32
    # NOTE: for real Linformer widths, pick dim as a multiple of 128 so the
    # output store is lane-dense; dim=32 here only to keep the demo small.

    kx, kw, kb = jax.random.split(key, 3)
    x = jax.random.normal(kx, (batch, seq, dim), dtype=jnp.float32)

    # Deterministic "func" params: Linear(dim, dim) (Kaiming-ish uniform range)
    bound = 1.0 / (dim ** 0.5)
    w = jax.random.uniform(kw, (dim, dim), jnp.float32, -bound, bound)
    b = jax.random.uniform(kb, (dim,), jnp.float32, -bound, bound)

    # LayerNorm params (PyTorch default init: ones / zeros)
    gamma = jnp.ones((dim,), jnp.float32)
    beta = jnp.zeros((dim,), jnp.float32)

    y = post_layer_norm(x, w, b, gamma, beta)
    y = jax.block_until_ready(y)

    y_ref = _reference(x, w, b, gamma, beta)
    assert y.shape == (batch, seq, dim)
    assert jnp.allclose(y, y_ref, atol=1e-5, rtol=1e-5), "mismatch vs reference"

    print("KERNEL_OK")
</pallas_src>

<mosaic_0001>
module attributes {stable_mosaic.version = 11 : i64} {
  func.func @_post_layernorm_kernel(%arg0: i32, %arg1: memref<16x32xf32, #tpu.memory_space<vmem>>, %arg2: memref<32x32xf32, #tpu.memory_space<vmem>>, %arg3: memref<1x32xf32, #tpu.memory_space<vmem>>, %arg4: memref<1x32xf32, #tpu.memory_space<vmem>>, %arg5: memref<1x32xf32, #tpu.memory_space<vmem>>, %arg6: memref<16x32xf32, #tpu.memory_space<vmem>>) attributes {dimension_semantics = [#tpu.dimension_semantics<parallel>], iteration_bounds = array<i64: 1>, scalar_prefetch = 0 : i64, scratch_operands = 0 : i64, tpu.core_type = #tpu.core_type<tc>, window_params = [{transform_indices = @transform_0, window_bounds = array<i64: 16, 32>}, {pipeline_mode = #tpu.pipeline_mode<synchronous>, transform_indices = @transform_1, window_bounds = array<i64: 32, 32>}, {pipeline_mode = #tpu.pipeline_mode<synchronous>, transform_indices = @transform_2, window_bounds = array<i64: 1, 32>}, {pipeline_mode = #tpu.pipeline_mode<synchronous>, transform_indices = @transform_3, window_bounds = array<i64: 1, 32>}, {pipeline_mode = #tpu.pipeline_mode<synchronous>, transform_indices = @transform_4, window_bounds = array<i64: 1, 32>}, {transform_indices = @transform_5, window_bounds = array<i64: 16, 32>}]} {
    %c0 = arith.constant 0 : index
    %c0_0 = arith.constant 0 : index
    %0 = vector.load %arg1[%c0, %c0_0] : memref<16x32xf32, #tpu.memory_space<vmem>>, vector<16x32xf32>
    %c0_1 = arith.constant 0 : index
    %c0_2 = arith.constant 0 : index
    %1 = vector.load %arg2[%c0_1, %c0_2] : memref<32x32xf32, #tpu.memory_space<vmem>>, vector<32x32xf32>
    %cst = arith.constant dense<0.000000e+00> : vector<16x32xf32>
    %2 = tpu.matmul %0, %1, %cst {dimension_numbers = #tpu.dot_dimension_numbers<[1], [0], [0], [1], [0, 0, 1, 1], [], []>} : vector<16x32xf32>, vector<32x32xf32>, vector<16x32xf32> -> vector<16x32xf32>
    %c0_3 = arith.constant 0 : index
    %c0_4 = arith.constant 0 : index
    %3 = vector.load %arg3[%c0_3, %c0_4] : memref<1x32xf32, #tpu.memory_space<vmem>>, vector<1x32xf32>
    %4 = vector.broadcast %3 : vector<1x32xf32> to vector<16x32xf32>
    %5 = arith.addf %2, %4 : vector<16x32xf32>
    %6 = arith.addf %5, %0 : vector<16x32xf32>
    %cst_5 = arith.constant dense<0.000000e+00> : vector<16xf32>
    %7 = vector.multi_reduction <add>, %6, %cst_5 [1] : vector<16x32xf32> to vector<16xf32>
    %8 = vector.shape_cast %7 : vector<16xf32> to vector<16x1xf32>
    %cst_6 = arith.constant 3.200000e+01 : f32
    %9 = vector.broadcast %cst_6 : f32 to vector<16x1xf32>
    %10 = arith.divf %8, %9 : vector<16x1xf32>
    %11 = vector.broadcast %10 : vector<16x1xf32> to vector<16x32xf32>
    %12 = arith.subf %6, %11 : vector<16x32xf32>
    %13 = arith.mulf %12, %12 : vector<16x32xf32>
    %cst_7 = arith.constant dense<0.000000e+00> : vector<16xf32>
    %14 = vector.multi_reduction <add>, %13, %cst_7 [1] : vector<16x32xf32> to vector<16xf32>
    %15 = vector.shape_cast %14 : vector<16xf32> to vector<16x1xf32>
    %cst_8 = arith.constant 3.200000e+01 : f32
    %16 = vector.broadcast %cst_8 : f32 to vector<16x1xf32>
    %17 = arith.divf %15, %16 : vector<16x1xf32>
    %cst_9 = arith.constant 9.99999974E-6 : f32
    %18 = vector.broadcast %cst_9 : f32 to vector<16x1xf32>
    %19 = arith.addf %17, %18 : vector<16x1xf32>
    %20 = math.rsqrt %19 : vector<16x1xf32>
    %21 = vector.broadcast %20 : vector<16x1xf32> to vector<16x32xf32>
    %22 = arith.mulf %12, %21 : vector<16x32xf32>
    %c0_10 = arith.constant 0 : index
    %c0_11 = arith.constant 0 : index
    %23 = vector.load %arg4[%c0_10, %c0_11] : memref<1x32xf32, #tpu.memory_space<vmem>>, vector<1x32xf32>
    %24 = vector.broadcast %23 : vector<1x32xf32> to vector<16x32xf32>
    %25 = arith.mulf %22, %24 : vector<16x32xf32>
    %c0_12 = arith.constant 0 : index
    %c0_13 = arith.constant 0 : index
    %26 = vector.load %arg5[%c0_12, %c0_13] : memref<1x32xf32, #tpu.memory_space<vmem>>, vector<1x32xf32>
    %27 = vector.broadcast %26 : vector<1x32xf32> to vector<16x32xf32>
    %28 = arith.addf %25, %27 : vector<16x32xf32>
    %c0_14 = arith.constant 0 : index
    %c0_15 = arith.constant 0 : index
    %29 = vector.load %arg6[%c0_14, %c0_15] : memref<16x32xf32, #tpu.memory_space<vmem>>, vector<16x32xf32>
    tpu.vector_store %arg6[%c0_14, %c0_15], %28 {strides = array<i32>} : memref<16x32xf32, #tpu.memory_space<vmem>>, vector<16x32xf32>,
    return
  }
  func.func @transform_0(%arg0: i32) -> (i32, i32) {
    %c0_i32 = arith.constant 0 : i32
    %c0_i32_0 = arith.constant 0 : i32
    return %arg0, %c0_i32 : i32, i32
  }
  func.func @transform_1(%arg0: i32) -> (i32, i32) {
    %c0_i32 = arith.constant 0 : i32
    %c0_i32_0 = arith.constant 0 : i32
    %c0_i32_1 = arith.constant 0 : i32
    return %c0_i32, %c0_i32_0 : i32, i32
  }
  func.func @transform_2(%arg0: i32) -> (i32, i32) {
    %c0_i32 = arith.constant 0 : i32
    %c0_i32_0 = arith.constant 0 : i32
    %c0_i32_1 = arith.constant 0 : i32
    return %c0_i32, %c0_i32_0 : i32, i32
  }
  func.func @transform_3(%arg0: i32) -> (i32, i32) {
    %c0_i32 = arith.constant 0 : i32
    %c0_i32_0 = arith.constant 0 : i32
    %c0_i32_1 = arith.constant 0 : i32
    return %c0_i32, %c0_i32_0 : i32, i32
  }
  func.func @transform_4(%arg0: i32) -> (i32, i32) {
    %c0_i32 = arith.constant 0 : i32
    %c0_i32_0 = arith.constant 0 : i32
    %c0_i32_1 = arith.constant 0 : i32
    return %c0_i32, %c0_i32_0 : i32, i32
  }
  func.func @transform_5(%arg0: i32) -> (i32, i32) {
    %c0_i32 = arith.constant 0 : i32
    %c0_i32_0 = arith.constant 0 : i32
    return %arg0, %c0_i32 : i32, i32
  }
}

</mosaic_0001>

<llo_original>
// kernel: post_layer_norm.1
$region0: #{post_layer_norm.1}
  #allocation0 [shape = 'u32[]', space=smem, size = 0x4, offset = 0x4, fixed_abs, tag = 'smem constant byte address 0x4 - core index']
  #allocation1 [shape = 'u32[144,128]{1,0:T(1,128)}', space=vmem, size = 0x12000, scoped, tag = 'internal scratch']
  %s0 = inlined_call_operand.vmem [shape: f32[16,32], index: 0, kind: input, shape index: {}]
  %s1 = inlined_call_operand.vmem [shape: f32[32,32], index: 1, kind: input, shape index: {}]
  %s2 = inlined_call_operand.vmem [shape: f32[1,32], index: 2, kind: input, shape index: {}]
  %s3 = inlined_call_operand.vmem [shape: f32[1,32], index: 3, kind: input, shape index: {}]
  %s4 = inlined_call_operand.vmem [shape: f32[1,32], index: 4, kind: input, shape index: {}]
  %s5 = inlined_call_operand.hbm [shape: f32[16,32], index: 5, kind: output, shape index: {}]
  %s6 = sld [smem:[#allocation0]]
  $region30: #{post_layer_norm.1} parent=0
    _
  %s8 = ssub.s32 1, %s6
  %s9 = scalar_select 0, %s8, %s6
  $region1: #{post_layer_norm.1} parent=0
    #allocation2 [shape = 'u8[8192]{0}', space=vmem, size = 0x2000, scoped, tag = 'output window, operand 0, single buffered']
    #allocation3 [shape = 's32[1]{0}', space=sflag, size = 0x4, scoped, tag = 'scoped memory for post_layer_norm.1']
    %10 = vsyncpa [#allocation3], 0
    // Predicated region
    $region2: #{post_layer_norm.1} parent=1 // pred_check
      _
    $region3: #{post_layer_norm.1} parent=1 // pred_check_branch
      %12 = sbr.rel (0) target = $region5
    $region4: #{post_layer_norm.1} parent=1 // pred_region
      _
    $region5: #{post_layer_norm.1} parent=1 // pred_fallthru
      _
    // Predicated region
    $region6: #{post_layer_norm.1} parent=1 // pred_check
      _
    $region7: #{post_layer_norm.1} parent=1 // pred_check_branch
      %14 = sbr.rel (0) target = $region9
    $region8: #{post_layer_norm.1} parent=1 // pred_region
      _
    $region9: #{post_layer_norm.1} parent=1 // pred_fallthru
      _
    // Predicated region
    $region10: #{post_layer_norm.1} parent=1 // pred_check
      _
    $region11: #{post_layer_norm.1} parent=1 // pred_check_branch
      %16 = sbr.rel (0) target = $region13
    $region12: #{post_layer_norm.1} parent=1 // pred_region
      _
    $region13: #{post_layer_norm.1} parent=1 // pred_fallthru
      _
    // Predicated region
    $region14: #{post_layer_norm.1} parent=1 // pred_check
      _
    $region15: #{post_layer_norm.1} parent=1 // pred_check_branch
      %18 = sbr.rel (0) target = $region17
    $region16: #{post_layer_norm.1} parent=1 // pred_region
      _
    $region17: #{post_layer_norm.1} parent=1 // pred_fallthru
      _
    // Predicated region
    $region18: #{post_layer_norm.1} parent=1 // pred_check
      _
    $region19: #{post_layer_norm.1} parent=1 // pred_check_branch
      %20 = sbr.rel (0) target = $region21
    $region20: #{post_layer_norm.1} parent=1 // pred_region
      _
    $region21: #{post_layer_norm.1} parent=1 // pred_fallthru
      _
    %v21 = vld [vmem:[%s0] sm:$0xff]
    %v22 = vld [vmem:[%s0 + $0x8] sm:$0xff]
    %v23 = vld [vmem:[%s1] sm:$0xff]
    %v24 = vld [vmem:[%s1 + $0x8] sm:$0xff]
    %v25 = vld [vmem:[%s1 + $0x10] sm:$0xff]
    %v26 = vld [vmem:[%s1 + $0x18] sm:$0xff]
    %v27 = vld [vmem:[%s2] sm:$0x1]
    %v29 = vlaneseq
    %v30 = vshrl.u32 %v29, 7
    %v31 = vsub.s32 0, %v30
    %v32 = vrot.slane %v27, %v31
    %vm34 = vcmask 261120
    %v36 = vsel %vm34, %v21, 0
    %v39 = vsel %vm34, %v22, 0
    %41 = vmatprep.subr.mxu0 0.0
    %42 = vmatpush1.msra.mxu0 0.0
    %43 = vmatprep.subr.mxu0 0.0
    %44 = vmatpush1.msra.mxu0 0.0
    %45 = vmatprep.subr.mxu0 0.0
    %46 = vmatpush1.msra.mxu0 0.0
    %47 = vmatprep.subr.mxu0 0.0
    %48 = vmatpush1.msra.mxu0 0.0
    %49 = vmatprep.subr.mxu0 0.0
    %50 = vmatpush1.msra.mxu0 0.0
    %51 = vmatprep.subr.mxu0 0.0
    %52 = vmatpush1.msra.mxu0 0.0
    %53 = vmatprep.subr.mxu0 0.0
    %54 = vmatpush1.msra.mxu0 0.0
    %55 = vmatprep.subr.mxu0 0.0
    %56 = vmatpush1.msra.mxu0 0.0
    %57 = vmatprep.subr.mxu0 0.0
    %58 = vmatpush1.msra.mxu0 0.0
    %59 = vmatprep.subr.mxu0 0.0
    %60 = vmatpush1.msra.mxu0 0.0
    %61 = vmatprep.subr.mxu0 0.0
    %62 = vmatpush1.msra.mxu0 0.0
    %63 = vmatprep.subr.mxu0 0.0
    %64 = vmatpush1.msra.mxu0 0.0
    %65 = vmatprep.subr.mxu0 0.0
    %66 = vmatpush1.msra.mxu0 %v26
    %67 = vmatprep.subr.mxu0 0.0
    %68 = vmatpush1.msra.mxu0 %v25
    %69 = vmatprep.subr.mxu0 0.0
    %70 = vmatpush1.msra.mxu0 %v24
    %71 = vmatprep.subr.mxu0 0.0
    %72 = vmatpush1.msra.mxu0 %v23
    %73 = vmatprep.subr.mxu0 0.0
    %74 = vmatpush2.msra.mxu0 0.0
    %75 = vmatprep.subr.mxu0 0.0
    %76 = vmatpush2.msra.mxu0 0.0
    %77 = vmatprep.subr.mxu0 0.0
    %78 = vmatpush2.msra.mxu0 0.0
    %79 = vmatprep.subr.mxu0 0.0
    %80 = vmatpush2.msra.mxu0 0.0
    %81 = vmatprep.subr.mxu0 0.0
    %82 = vmatpush2.msra.mxu0 0.0
    %83 = vmatprep.subr.mxu0 0.0
    %84 = vmatpush2.msra.mxu0 0.0
    %85 = vmatprep.subr.mxu0 0.0
    %86 = vmatpush2.msra.mxu0 0.0
    %87 = vmatprep.subr.mxu0 0.0
    %88 = vmatpush2.msra.mxu0 0.0
    %89 = vmatprep.subr.mxu0 0.0
    %90 = vmatpush2.msra.mxu0 0.0
    %91 = vmatprep.subr.mxu0 0.0
    %92 = vmatpush2.msra.mxu0 0.0
    %93 = vmatprep.subr.mxu0 0.0
    %94 = vmatpush2.msra.mxu0 0.0
    %95 = vmatprep.subr.mxu0 0.0
    %96 = vmatpush2.msra.mxu0 0.0
    %97 = vmatprep.subr.mxu0 0.0
    %98 = vmatpush2.msra.mxu0 0.0
    %99 = vmatprep.subr.mxu0 0.0
    %100 = vmatpush2.msra.mxu0 0.0
    %101 = vmatprep.subr.mxu0 0.0
    %102 = vmatpush2.msra.mxu0 0.0
    %103 = vmatprep.subr.mxu0 0.0
    %104 = vmatpush2.msra.mxu0 0.0
    %105 = vmatprep.mubr.f32.mxu0 0.0
    %106 = vmatmul.mubr.f32.gmra.mxu0 %v36
    %v107 = vpop.f32.mrf.mxu0
    %v108 = vadd.f32 %v32, %v107
    %v109 = vpop.f32.mrf.mxu0
    %110 = vmatprep.mubr.f32.mxu0 0.0
    %111 = vmatmul.mubr.f32.gmra.mxu0 %v39
    %v112 = vpop.f32.mrf.mxu0
    %v113 = vadd.f32 %v32, %v112
    %v114 = vpop.f32.mrf.mxu0
    %115 = vdwg.mxu0
    %v116 = vadd.f32 %v108, %v21
    %v117 = vadd.f32 %v113, %v22
    %v118 = vsel %vm34, %v116, 0.0
    %119 = vadd.xlane.f32.xlu0 %v118
    %v120 = vpop.xlane.xlu0 %119
    %v121 = vsel %vm34, %v117, 0.0
    %122 = vadd.xlane.f32.xlu0 %v121
    %v123 = vpop.xlane.xlu0 %122
    %v124 = vrcp.pop 32.0
    %v125 = vmul.f32 %v120, %v124
    %v126 = vmul.f32 %v123, %v124
    %v127 = vsub.f32 %v116, %v125
    %v128 = vsub.f32 %v117, %v126
    %v129 = vmul.f32 %v127, %v127
    %v130 = vmul.f32 %v128, %v128
    %v131 = vsel %vm34, %v129, 0.0
    %132 = vadd.xlane.f32.xlu0 %v131
    %v133 = vpop.xlane.xlu0 %132
    %v134 = vsel %vm34, %v130, 0.0
    %135 = vadd.xlane.f32.xlu0 %v134
    %v136 = vpop.xlane.xlu0 %135
    %v137 = vmul.f32 %v133, %v124
    %v138 = vmul.f32 %v136, %v124
    %v139 = vadd.f32 %v137, 1e-05
    %v140 = vadd.f32 %v138, 1e-05
    %v141 = vrsqrt.pop %v139
    %v142 = vrsqrt.pop %v140
    %v143 = vmul.f32 %v127, %v141
    %v144 = vmul.f32 %v128, %v142
    %v145 = vld [vmem:[%s3] sm:$0x1]
    %v147 = vlaneseq
    %v148 = vshrl.u32 %v147, 7
    %v149 = vsub.s32 0, %v148
    %v150 = vrot.slane %v145, %v149
    %v152 = vmul.f32 %v143, %v150
    %v153 = vmul.f32 %v144, %v150
    %v154 = vld [vmem:[%s4] sm:$0x1]
    %v156 = vlaneseq
    %v157 = vshrl.u32 %v156, 7
    %v158 = vsub.s32 0, %v157
    %v159 = vrot.slane %v154, %v158
    %v161 = vadd.f32 %v152, %v159
    %v162 = vadd.f32 %v153, %v159
    %163 = vst.msk [vmem:[#allocation2] sm:$0xff] %vm34, %v161
    %164 = vst.msk [vmem:[#allocation2 + $0x8] sm:$0xff] %vm34, %v162
    // Predicated region
    $region22: #{post_layer_norm.1} parent=1 // pred_check
      _
    $region23: #{post_layer_norm.1} parent=1 // pred_check_branch
      %166 = sbr.rel (0) target = $region25
    $region24: #{post_layer_norm.1} parent=1 // pred_region
      %s168 = ssub.s32 256, 256
      %169 = vsyncadd [#allocation3], %s168
      %s170 = sshll.u32 [#allocation2], 4
      %s171 = int_to_ptr.vmem [resolvable:$true] %s170
      %176 = dma.vmem_to_hbm [thread:$0]  %s171, 256, %s5, [#allocation3], 128, 128, 8
    $region25: #{post_layer_norm.1} parent=1 // pred_fallthru
      _
    // Predicated region
    $region26: #{post_layer_norm.1} parent=1 // pred_check
      _
    $region27: #{post_layer_norm.1} parent=1 // pred_check_branch
      %178 = sbr.rel (0) target = $region29
    $region28: #{post_layer_norm.1} parent=1 // pred_region
      %179 = dma.done [#allocation3], 256
    $region29: #{post_layer_norm.1} parent=1 // pred_fallthru
      _
    %180 = vsyncpa [#allocation3], 1

</llo_original>
